<compile_context>
chip_gen: v7x
topology: tpu7x:2x2x1
jax: 0.10.0
libtpu: 0.0.40
codegen_flags: <defaults>
</compile_context>

<pallas_src>
import functools

import jax
import jax.numpy as jnp
from jax.experimental import pallas as pl
from jax.experimental.pallas import tpu as pltpu

CFG = {'batch_size': 128, 'learning_rate': 0.001, 'epoch': 3, 'lambda': 0.999}


# --------------- fused linear + cross-entropy + curvature + loss kernel ---------------

def _fused_loss_kernel(a_ref, w_ref, b_ref, y_ref,
                       loss_ref, ce_ref, curv_ref, *, inv_batch, lam):
    a = a_ref[...]                                                      # (B, D) f32
    # logits = a @ W + b   (MXU matmul with f32 accumulate, VPU broadcast add).
    logits = (jnp.dot(a, w_ref[...], preferred_element_type=jnp.float32)
              + b_ref[...])                                             # (B, C)
    B, C = logits.shape

    # Numerically-stable log-sum-exp (EUP exp/log, XLU row reductions).
    m = jnp.max(logits, axis=-1, keepdims=True)                         # (B, 1)
    e = jnp.exp(logits - m)                                             # (B, C)
    se = jnp.sum(e, axis=-1, keepdims=True)                             # (B, 1)
    lse = m + jnp.log(se)                                               # (B, 1)

    # Pick the label logit with an iota==label mask — no one-hot DMA'd in.
    # (Assumes labels lie in [0, C); out-of-range labels would yield picked=0.)
    cls = jax.lax.broadcasted_iota(jnp.int32, (B, C), 1)                # (B, C)
    mask = cls == y_ref[...]                                            # (B,C) vs (B,1)
    picked = jnp.sum(jnp.where(mask, logits, 0.0), axis=-1, keepdims=True)

    # Mean CE: multiply by precomputed 1/B (no per-call division).
    ce = jnp.sum(lse - picked) * inv_batch

    # curvature = 1ᵀ H 1 (sum of the (W,b)-Hessian of CE) in closed form:
    #   H = (1/B) Σ_i Jᵢᵀ (diag(pᵢ) − pᵢpᵢᵀ) Jᵢ,  z = aW + b is linear in (W, b),
    #   Jᵢ·1 = vᵢ·1 with vᵢ = 1 + Σ_d a_{i,d}
    #   ⇒ 1ᵀH1 = (1/B) Σ_i vᵢ² (sᵢ − sᵢ²),  sᵢ = Σ_c p_{i,c}   (≡ 0 analytically).
    p = jnp.exp(logits - lse)                                           # softmax probs
    s = jnp.sum(p, axis=-1, keepdims=True)                              # (B, 1) ≈ 1
    v = 1.0 + jnp.sum(a, axis=-1, keepdims=True)                        # (B, 1)
    curv = jnp.sum(v * v * (s - s * s)) * inv_batch

    loss = ce * lam + curv * (1.0 - lam)

    loss_ref[0, 0] = loss
    ce_ref[0, 0] = ce
    curv_ref[0, 0] = curv


def my_loss(a, y, W, b):
    """One pallas_call: logits/probs stay in VMEM, three scalars leave via SMEM."""
    B, D = a.shape
    C = W.shape[1]
    kern = functools.partial(_fused_loss_kernel,
                             inv_batch=1.0 / B,
                             lam=float(CFG['lambda']))
    loss, ce, curv = pl.pallas_call(
        kern,
        out_shape=(jax.ShapeDtypeStruct((1, 1), jnp.float32),   # loss
                   jax.ShapeDtypeStruct((1, 1), jnp.float32),   # cross_entropy
                   jax.ShapeDtypeStruct((1, 1), jnp.float32)),  # curvature
        in_specs=[pl.BlockSpec(memory_space=pltpu.MemorySpace.VMEM),   # a   (B, D)
                  pl.BlockSpec(memory_space=pltpu.MemorySpace.VMEM),   # W   (D, C)
                  pl.BlockSpec(memory_space=pltpu.MemorySpace.VMEM),   # b   (1, C)
                  pl.BlockSpec(memory_space=pltpu.MemorySpace.VMEM)],  # y   (B, 1) i32
        out_specs=(pl.BlockSpec(memory_space=pltpu.MemorySpace.SMEM),
                   pl.BlockSpec(memory_space=pltpu.MemorySpace.SMEM),
                   pl.BlockSpec(memory_space=pltpu.MemorySpace.SMEM)),
    )(a, W, b.reshape(1, C), y.reshape(B, 1).astype(jnp.int32))

    # TODO(synk): torch.eig(hesse) in the original is computed but unused; no
    # eigendecomposition (and no dense Hessian) is reproduced here.
    return loss[0, 0], ce[0, 0], curv[0, 0]


# ----------------------------------- main ------------------------------------

if __name__ == "__main__":
    key = jax.random.PRNGKey(0)
    kA, kW, kb, ky = jax.random.split(key, 4)

    B, D, C = 8, 32, 8    # small shapes: batch=8, hidden=32, classes=8
    a = jax.random.normal(kA, (B, D), dtype=jnp.float32)
    W = jax.random.normal(kW, (D, C), dtype=jnp.float32) * 0.1   # deterministic params
    b = jax.random.normal(kb, (C,), dtype=jnp.float32) * 0.1
    y = jax.random.randint(ky, (B,), 0, C)

    loss, ce, curv = jax.jit(my_loss)(a, y, W, b)
    jax.block_until_ready((loss, ce, curv))
    print("KERNEL_OK")
</pallas_src>

<mosaic_0001>
module attributes {stable_mosaic.version = 11 : i64} {
  func.func @_fused_loss_kernel(%arg0: memref<8x32xf32, #tpu.memory_space<vmem>>, %arg1: memref<32x8xf32, #tpu.memory_space<vmem>>, %arg2: memref<1x8xf32, #tpu.memory_space<vmem>>, %arg3: memref<8x1xi32, #tpu.memory_space<vmem>>, %arg4: memref<1x1xf32, #tpu.memory_space<smem>>, %arg5: memref<1x1xf32, #tpu.memory_space<smem>>, %arg6: memref<1x1xf32, #tpu.memory_space<smem>>) attributes {dimension_semantics = [], scalar_prefetch = 0 : i64, scratch_operands = 0 : i64, tpu.core_type = #tpu.core_type<tc>} {
    %c0 = arith.constant 0 : index
    %c0_0 = arith.constant 0 : index
    %0 = vector.load %arg0[%c0, %c0_0] : memref<8x32xf32, #tpu.memory_space<vmem>>, vector<8x32xf32>
    %c0_1 = arith.constant 0 : index
    %c0_2 = arith.constant 0 : index
    %1 = vector.load %arg1[%c0_1, %c0_2] : memref<32x8xf32, #tpu.memory_space<vmem>>, vector<32x8xf32>
    %cst = arith.constant dense<0.000000e+00> : vector<8x8xf32>
    %2 = tpu.matmul %0, %1, %cst {dimension_numbers = #tpu.dot_dimension_numbers<[1], [0], [0], [1], [0, 0, 1, 1], [], []>} : vector<8x32xf32>, vector<32x8xf32>, vector<8x8xf32> -> vector<8x8xf32>
    %c0_3 = arith.constant 0 : index
    %c0_4 = arith.constant 0 : index
    %3 = vector.load %arg2[%c0_3, %c0_4] : memref<1x8xf32, #tpu.memory_space<vmem>>, vector<1x8xf32>
    %4 = vector.broadcast %3 : vector<1x8xf32> to vector<8x8xf32>
    %5 = arith.addf %2, %4 : vector<8x8xf32>
    %cst_5 = arith.constant dense<0xFF800000> : vector<8xf32>
    %6 = vector.multi_reduction <maximumf>, %5, %cst_5 [1] : vector<8x8xf32> to vector<8xf32>
    %7 = vector.shape_cast %6 : vector<8xf32> to vector<8x1xf32>
    %8 = vector.broadcast %7 : vector<8x1xf32> to vector<8x8xf32>
    %9 = arith.subf %5, %8 : vector<8x8xf32>
    %10 = math.exp %9 : vector<8x8xf32>
    %cst_6 = arith.constant dense<0.000000e+00> : vector<8xf32>
    %11 = vector.multi_reduction <add>, %10, %cst_6 [1] : vector<8x8xf32> to vector<8xf32>
    %12 = vector.shape_cast %11 : vector<8xf32> to vector<8x1xf32>
    %13 = math.log %12 : vector<8x1xf32>
    %14 = arith.addf %7, %13 : vector<8x1xf32>
    %15 = tpu.iota {dimensions = array<i32: 1>} : vector<8x8xi32>
    %c0_7 = arith.constant 0 : index
    %c0_8 = arith.constant 0 : index
    %16 = vector.load %arg3[%c0_7, %c0_8] : memref<8x1xi32, #tpu.memory_space<vmem>>, vector<8x1xi32>
    %17 = vector.broadcast %16 : vector<8x1xi32> to vector<8x8xi32>
    %18 = arith.cmpi eq, %15, %17 : vector<8x8xi32>
    %cst_9 = arith.constant 0.000000e+00 : f32
    %19 = vector.broadcast %cst_9 : f32 to vector<8x8xf32>
    %20 = arith.select %18, %5, %19 : vector<8x8xi1>, vector<8x8xf32>
    %cst_10 = arith.constant dense<0.000000e+00> : vector<8xf32>
    %21 = vector.multi_reduction <add>, %20, %cst_10 [1] : vector<8x8xf32> to vector<8xf32>
    %22 = vector.shape_cast %21 : vector<8xf32> to vector<8x1xf32>
    %23 = arith.subf %14, %22 : vector<8x1xf32>
    %24 = vector.shape_cast %23 : vector<8x1xf32> to vector<1x8x1xf32>
    %cst_11 = arith.constant dense<0.000000e+00> : vector<1xf32>
    %25 = vector.multi_reduction <add>, %24, %cst_11 [1, 2] : vector<1x8x1xf32> to vector<1xf32>
    %26 = vector.shape_cast %25 : vector<1xf32> to vector<1x1x1xf32>
    %27 = vector.extract %26[0, 0, 0] : f32 from vector<1x1x1xf32>
    %cst_12 = arith.constant 1.250000e-01 : f32
    %28 = arith.mulf %27, %cst_12 : f32
    %29 = vector.broadcast %14 : vector<8x1xf32> to vector<8x8xf32>
    %30 = arith.subf %5, %29 : vector<8x8xf32>
    %31 = math.exp %30 : vector<8x8xf32>
    %cst_13 = arith.constant dense<0.000000e+00> : vector<8xf32>
    %32 = vector.multi_reduction <add>, %31, %cst_13 [1] : vector<8x8xf32> to vector<8xf32>
    %33 = vector.shape_cast %32 : vector<8xf32> to vector<8x1xf32>
    %cst_14 = arith.constant dense<0.000000e+00> : vector<8xf32>
    %34 = vector.multi_reduction <add>, %0, %cst_14 [1] : vector<8x32xf32> to vector<8xf32>
    %35 = vector.shape_cast %34 : vector<8xf32> to vector<8x1xf32>
    %cst_15 = arith.constant 1.000000e+00 : f32
    %36 = vector.broadcast %cst_15 : f32 to vector<8x1xf32>
    %37 = arith.addf %36, %35 : vector<8x1xf32>
    %38 = arith.mulf %37, %37 : vector<8x1xf32>
    %39 = arith.mulf %33, %33 : vector<8x1xf32>
    %40 = arith.subf %33, %39 : vector<8x1xf32>
    %41 = arith.mulf %38, %40 : vector<8x1xf32>
    %42 = vector.shape_cast %41 : vector<8x1xf32> to vector<1x8x1xf32>
    %cst_16 = arith.constant dense<0.000000e+00> : vector<1xf32>
    %43 = vector.multi_reduction <add>, %42, %cst_16 [1, 2] : vector<1x8x1xf32> to vector<1xf32>
    %44 = vector.shape_cast %43 : vector<1xf32> to vector<1x1x1xf32>
    %45 = vector.extract %44[0, 0, 0] : f32 from vector<1x1x1xf32>
    %cst_17 = arith.constant 1.250000e-01 : f32
    %46 = arith.mulf %45, %cst_17 : f32
    %cst_18 = arith.constant 9.990000e-01 : f32
    %47 = arith.mulf %28, %cst_18 : f32
    %cst_19 = arith.constant 1.000000e-03 : f32
    %48 = arith.mulf %46, %cst_19 : f32
    %49 = arith.addf %47, %48 : f32
    %c0_20 = arith.constant 0 : index
    %c0_21 = arith.constant 0 : index
    %50 = memref.load %arg4[%c0_20, %c0_21] : memref<1x1xf32, #tpu.memory_space<smem>>
    memref.store %49, %arg4[%c0_20, %c0_21] : memref<1x1xf32, #tpu.memory_space<smem>>
    %c0_22 = arith.constant 0 : index
    %c0_23 = arith.constant 0 : index
    %51 = memref.load %arg5[%c0_22, %c0_23] : memref<1x1xf32, #tpu.memory_space<smem>>
    memref.store %28, %arg5[%c0_22, %c0_23] : memref<1x1xf32, #tpu.memory_space<smem>>
    %c0_24 = arith.constant 0 : index
    %c0_25 = arith.constant 0 : index
    %52 = memref.load %arg6[%c0_24, %c0_25] : memref<1x1xf32, #tpu.memory_space<smem>>
    memref.store %46, %arg6[%c0_24, %c0_25] : memref<1x1xf32, #tpu.memory_space<smem>>
    return
  }
}

</mosaic_0001>

<llo_original>
// kernel: my_loss.1
$region0: #{my_loss.1}
  #allocation0 [shape = 'u32[]', space=smem, size = 0x4, offset = 0x4, fixed_abs, tag = 'smem constant byte address 0x4 - core index']
  #allocation1 [shape = 'u32[144,128]{1,0:T(1,128)}', space=vmem, size = 0x12000, scoped, tag = 'internal scratch']
  %s0 = inlined_call_operand.vmem [shape: f32[8,32], index: 0, kind: input, shape index: {}]
  %s1 = inlined_call_operand.vmem [shape: f32[32,8], index: 1, kind: input, shape index: {}]
  %s2 = inlined_call_operand.vmem [shape: f32[1,8], index: 2, kind: input, shape index: {}]
  %s3 = inlined_call_operand.vmem [shape: s32[8,1], index: 3, kind: input, shape index: {}]
  %s4 = inlined_call_operand.hbm [shape: f32[1,1], index: 4, kind: output, shape index: {0}]
  %s5 = inlined_call_operand.hbm [shape: f32[1,1], index: 5, kind: output, shape index: {1}]
  %s6 = inlined_call_operand.hbm [shape: f32[1,1], index: 6, kind: output, shape index: {2}]
  %7 = xla_tuple %s4, %s5, %s6
  %s8 = sld [smem:[#allocation0]]
  $region42: #{my_loss.1} parent=0
    _
  %s10 = ssub.s32 1, %s8
  %s11 = scalar_select 0, %s10, %s8
  $region1: #{my_loss.1} parent=0
    #allocation2 [shape = 'u8[512]{0}', space=smem, size = 0x200, scoped, tag = 'output window, operand 0, single buffered']
    #allocation3 [shape = 's32[1]{0}', space=sflag, size = 0x4, scoped, tag = 'scoped memory for my_loss.1']
    #allocation4 [shape = 'u8[512]{0}', space=smem, size = 0x200, scoped, tag = 'output window, operand 1, single buffered']
    #allocation5 [shape = 's32[1]{0}', space=sflag, size = 0x4, scoped, tag = 'scoped memory for my_loss.1']
    #allocation6 [shape = 'u8[512]{0}', space=smem, size = 0x200, scoped, tag = 'output window, operand 2, single buffered']
    %12 = vsyncpa [#allocation3], 0
    %13 = vsyncpa [#allocation5], 0
    // Predicated region
    $region2: #{my_loss.1} parent=1 // pred_check
      _
    $region3: #{my_loss.1} parent=1 // pred_check_branch
      %15 = sbr.rel (0) target = $region5
    $region4: #{my_loss.1} parent=1 // pred_region
      _
    $region5: #{my_loss.1} parent=1 // pred_fallthru
      _
    // Predicated region
    $region6: #{my_loss.1} parent=1 // pred_check
      _
    $region7: #{my_loss.1} parent=1 // pred_check_branch
      %17 = sbr.rel (0) target = $region9
    $region8: #{my_loss.1} parent=1 // pred_region
      _
    $region9: #{my_loss.1} parent=1 // pred_fallthru
      _
    // Predicated region
    $region10: #{my_loss.1} parent=1 // pred_check
      _
    $region11: #{my_loss.1} parent=1 // pred_check_branch
      %19 = sbr.rel (0) target = $region13
    $region12: #{my_loss.1} parent=1 // pred_region
      _
    $region13: #{my_loss.1} parent=1 // pred_fallthru
      _
    // Predicated region
    $region14: #{my_loss.1} parent=1 // pred_check
      _
    $region15: #{my_loss.1} parent=1 // pred_check_branch
      %21 = sbr.rel (0) target = $region17
    $region16: #{my_loss.1} parent=1 // pred_region
      _
    $region17: #{my_loss.1} parent=1 // pred_fallthru
      _
    %v22 = vld [vmem:[%s0] sm:$0xff]
    %v23 = vld [vmem:[%s1] sm:$0xff]
    %v24 = vld [vmem:[%s1 + $0x8] sm:$0xff]
    %v25 = vld [vmem:[%s1 + $0x10] sm:$0xff]
    %v26 = vld [vmem:[%s1 + $0x18] sm:$0xff]
    %v27 = vld [vmem:[%s2] sm:$0x1]
    %v29 = vlaneseq
    %v30 = vshrl.u32 %v29, 7
    %v31 = vsub.s32 0, %v30
    %v32 = vrot.slane %v27, %v31
    %vm34 = vcmask 261120
    %v36 = vsel %vm34, %v22, 0
    %38 = vmatprep.subr.mxu0 0.0
    %39 = vmatpush1.msra.mxu0 %v23
    %40 = vmatprep.subr.mxu0 0.0
    %41 = vmatpush1.msra.mxu0 %v24
    %42 = vmatprep.subr.mxu0 0.0
    %43 = vmatpush1.msra.mxu0 %v25
    %44 = vmatprep.subr.mxu0 0.0
    %45 = vmatpush1.msra.mxu0 %v26
    %46 = vmatprep.subr.mxu0 0.0
    %47 = vmatpush1.msra.mxu0 0.0
    %48 = vmatprep.subr.mxu0 0.0
    %49 = vmatpush1.msra.mxu0 0.0
    %50 = vmatprep.subr.mxu0 0.0
    %51 = vmatpush1.msra.mxu0 0.0
    %52 = vmatprep.subr.mxu0 0.0
    %53 = vmatpush1.msra.mxu0 0.0
    %54 = vmatprep.subr.mxu0 0.0
    %55 = vmatpush1.msra.mxu0 0.0
    %56 = vmatprep.subr.mxu0 0.0
    %57 = vmatpush1.msra.mxu0 0.0
    %58 = vmatprep.subr.mxu0 0.0
    %59 = vmatpush1.msra.mxu0 0.0
    %60 = vmatprep.subr.mxu0 0.0
    %61 = vmatpush1.msra.mxu0 0.0
    %62 = vmatprep.subr.mxu0 0.0
    %63 = vmatpush1.msra.mxu0 0.0
    %64 = vmatprep.subr.mxu0 0.0
    %65 = vmatpush1.msra.mxu0 0.0
    %66 = vmatprep.subr.mxu0 0.0
    %67 = vmatpush1.msra.mxu0 0.0
    %68 = vmatprep.subr.mxu0 0.0
    %69 = vmatpush1.msra.mxu0 0.0
    %70 = vmatprep.subr.mxu0 0.0
    %71 = vmatpush1.msra.mxu0 0.0
    %72 = vmatprep.subr.mxu0 0.0
    %73 = vmatpush1.msra.mxu0 0.0
    %74 = vmatprep.subr.mxu0 0.0
    %75 = vmatpush1.msra.mxu0 0.0
    %76 = vmatprep.subr.mxu0 0.0
    %77 = vmatpush1.msra.mxu0 0.0
    %78 = vmatprep.subr.mxu0 0.0
    %79 = vmatpush1.msra.mxu0 0.0
    %80 = vmatprep.subr.mxu0 0.0
    %81 = vmatpush1.msra.mxu0 0.0
    %82 = vmatprep.subr.mxu0 0.0
    %83 = vmatpush1.msra.mxu0 0.0
    %84 = vmatprep.subr.mxu0 0.0
    %85 = vmatpush1.msra.mxu0 0.0
    %86 = vmatprep.subr.mxu0 0.0
    %87 = vmatpush1.msra.mxu0 0.0
    %88 = vmatprep.subr.mxu0 0.0
    %89 = vmatpush1.msra.mxu0 0.0
    %90 = vmatprep.subr.mxu0 0.0
    %91 = vmatpush1.msra.mxu0 0.0
    %92 = vmatprep.subr.mxu0 0.0
    %93 = vmatpush1.msra.mxu0 0.0
    %94 = vmatprep.subr.mxu0 0.0
    %95 = vmatpush1.msra.mxu0 0.0
    %96 = vmatprep.subr.mxu0 0.0
    %97 = vmatpush1.msra.mxu0 0.0
    %98 = vmatprep.subr.mxu0 0.0
    %99 = vmatpush1.msra.mxu0 0.0
    %100 = vmatprep.subr.mxu0 0.0
    %101 = vmatpush1.msra.mxu0 0.0
    %102 = vmatprep.mubr.f32.mxu0 0.0
    %103 = vmatmul.mubr.f32.gmra.mrb[0].mxu0 %v36
    %v104 = vpop.f32.mrb[0].mxu0
    %v105 = vadd.f32 %v32, %v104
    %v106 = vpop.f32.mrb[0].mxu0
    %107 = vdwg.mxu0
    %vm108 = vcmask 64512
    %v109 = vsel %vm108, %v105, -inf
    %110 = vmax.xlane.f32.xlu0 %v109
    %v111 = vpop.xlane.xlu0 %110
    %v112 = vsub.f32 %v105, %v111
    %v113 = vmul.f32 %v112, 1.442695
    %v114 = vpow.pop %v113
    %v115 = vsel %vm108, %v114, 0.0
    %116 = vadd.xlane.f32.xlu0 %v115
    %v117 = vpop.xlane.xlu0 %116
    %v118 = vlog2.pop %v117
    %v119 = vmul.f32 %v118, 0.6931472
    %v120 = vadd.f32 %v111, %v119
    %v121 = vlaneseq
    %v122 = vand.u32 %v121, 127
    %v123 = vld [vmem:[%s3] sm:$0xff]
    %124 = vset.pattern.permute.xlu0 0
    %125 = vperm.xlu0 %124, %v123
    %v126 = vpop.permute.xlu0 %125
    %vm127 = vcmp.eq.s32.totalorder %v122, %v126
    %v128 = vsel %vm127, %v105, 0.0
    %v129 = vsel %vm108, %v128, 0.0
    %130 = vadd.xlane.f32.xlu0 %v129
    %v131 = vpop.xlane.xlu0 %130
    %v132 = vsub.f32 %v120, %v131
    %vm133 = vcmask 7168
    %v134 = vsel %vm133, %v132, 0.0
    %135 = vadd.xlane.f32.xlu0 %v134
    %v136 = vpop.xlane.xlu0 %135
    %v137 = vrot.slane %v136, 4
    %v138 = vadd.f32 %v136, %v137
    %v139 = vrot.slane %v138, 2
    %v140 = vadd.f32 %v138, %v139
    %v141 = vrot.slane %v140, 1
    %v142 = vadd.f32 %v140, %v141
    %s143 = vtos %v142
    %s144 = smul.f32 %s143, 0.125
    %v145 = vsub.f32 %v105, %v120
    %v146 = vmul.f32 %v145, 1.442695
    %v147 = vpow.pop %v146
    %v148 = vsel %vm108, %v147, 0.0
    %149 = vadd.xlane.f32.xlu0 %v148
    %v150 = vpop.xlane.xlu0 %149
    %v151 = vsel %vm34, %v22, 0.0
    %152 = vadd.xlane.f32.xlu0 %v151
    %v153 = vpop.xlane.xlu0 %152
    %v154 = vadd.f32 %v153, 1.0
    %v155 = vmul.f32 %v154, %v154
    %v156 = vmul.f32 %v150, %v150
    %v157 = vsub.f32 %v150, %v156
    %v158 = vmul.f32 %v155, %v157
    %v159 = vsel %vm133, %v158, 0.0
    %160 = vadd.xlane.f32.xlu0 %v159
    %v161 = vpop.xlane.xlu0 %160
    %v162 = vrot.slane %v161, 4
    %v163 = vadd.f32 %v161, %v162
    %v164 = vrot.slane %v163, 2
    %v165 = vadd.f32 %v163, %v164
    %v166 = vrot.slane %v165, 1
    %v167 = vadd.f32 %v165, %v166
    %s168 = vtos %v167
    %s169 = smul.f32 %s168, 0.125
    %s170 = smul.f32 %s144, 0.999
    %s171 = smul.f32 %s169, 0.001
    %s172 = sadd.f32 %s170, %s171
    %s173 = scalar_lea.smem [#allocation2], 0
    %174 = sst [smem:[%s173]] %s172
    %s175 = scalar_lea.smem [#allocation4], 0
    %176 = sst [smem:[%s175]] %s144
    %s177 = scalar_lea.smem [#allocation6], 0
    %178 = sst [smem:[%s177]] %s169
    // Predicated region
    $region18: #{my_loss.1} parent=1 // pred_check
      _
    $region19: #{my_loss.1} parent=1 // pred_check_branch
      %180 = sbr.rel (0) target = $region21
    $region20: #{my_loss.1} parent=1 // pred_region
      %s182 = ssub.s32 16, 16
      %183 = vsyncadd [#allocation3], %s182
      %186 = dma.smem_to_hbm [#allocation2], 16, %s4, [#allocation3]
    $region21: #{my_loss.1} parent=1 // pred_fallthru
      _
    // Predicated region
    $region22: #{my_loss.1} parent=1 // pred_check
      _
    $region23: #{my_loss.1} parent=1 // pred_check_branch
      %188 = sbr.rel (0) target = $region25
    $region24: #{my_loss.1} parent=1 // pred_region
      %s190 = ssub.s32 16, 16
      %191 = vsyncadd [#allocation5], %s190
      %194 = dma.smem_to_hbm [#allocation4], 16, %s5, [#allocation5]
    $region25: #{my_loss.1} parent=1 // pred_fallthru
      _
    // Predicated region
    $region26: #{my_loss.1} parent=1 // pred_check
      _
    $region27: #{my_loss.1} parent=1 // pred_check_branch
      %196 = sbr.rel (0) target = $region29
    $region28: #{my_loss.1} parent=1 // pred_region
      %s198 = ssub.s32 16, 16
      %199 = vsyncadd [#allocation5], %s198
      %202 = dma.smem_to_hbm [#allocation6], 16, %s6, [#allocation5]
    $region29: #{my_loss.1} parent=1 // pred_fallthru
      _
    // Predicated region
    $region30: #{my_loss.1} parent=1 // pred_check
      _
    $region31: #{my_loss.1} parent=1 // pred_check_branch
      %204 = sbr.rel (0) target = $region33
    $region32: #{my_loss.1} parent=1 // pred_region
      %205 = dma.done [#allocation3], 16
    $region33: #{my_loss.1} parent=1 // pred_fallthru
      _
    // Predicated region
    $region34: #{my_loss.1} parent=1 // pred_check
      _
    $region35: #{my_loss.1} parent=1 // pred_check_branch
      %207 = sbr.rel (0) target = $region37
    $region36: #{my_loss.1} parent=1 // pred_region
      %208 = dma.done [#allocation5], 16
    $region37: #{my_loss.1} parent=1 // pred_fallthru
      _
    // Predicated region
    $region38: #{my_loss.1} parent=1 // pred_check
      _
    $region39: #{my_loss.1} parent=1 // pred_check_branch
      %210 = sbr.rel (0) target = $region41
    $region40: #{my_loss.1} parent=1 // pred_region
      %211 = dma.done [#allocation5], 16
    $region41: #{my_loss.1} parent=1 // pred_fallthru
      _
    %212 = sfence
    %213 = vsyncpa [#allocation3], 1
    %214 = vsyncpa [#allocation5], 1

</llo_original>
